<compile_context>
chip_gen: v6e
topology: v6e:2x2x1
jax: 0.10.0
libtpu: 0.0.40
codegen_flags: <defaults>
</compile_context>

<pallas_src>
import math

import numpy as np
import jax
import jax.numpy as jnp
from jax.experimental import pallas as pl
from jax.experimental.pallas import tpu as pltpu

TARGET_BLOCK_BYTES = 4 << 20          # ~4 MiB per block (>=1 MiB reaches ~85% HBM roofline)
VMEM_LIMIT_BYTES = 48 * 1024 * 1024   # explicit budget: fits v7x (64 MiB), raises v5e's 16 MiB default


def _gk_kernel(u_ref, p_ref, z_ref):
    # Purely element-wise: VPU + EUP only (3 transcendentals/elem: tanh, log1p, exp).
    u = u_ref[...].astype(jnp.float32)      # (tile, W) native dtype -> f32 in-kernel
    p = p_ref[...]                          # (4, W) f32 packed params (a, b, g, k)
    a = p[0:1, :]
    b = p[1:2, :]
    g = p[2:3, :]
    k = p[3:4, :]

    # (1 - e^{-x}) / (1 + e^{-x}) == tanh(x / 2)   (exact, bounded)
    skew = 1.0 + 0.8 * jnp.tanh(0.5 * (g * u))
    # (1 + u^2)^k with base >= 1, via exp(k * log1p(u^2))
    kurt = jnp.exp(k * jnp.log1p(u * u))
    z_ref[...] = (a + b * skew * kurt * u).astype(z_ref.dtype)


def make_gk_params(a, b, g, k):
    """Pack (and pre-tile) the four (D,) parameter vectors once at init.

    Returns a dict holding the plain (4, D) packing and, when D is not a multiple
    of 128, a lane-dense (4, D*rg) tiling with rg = 128 / gcd(D, 128).
    """
    a = jnp.asarray(a, jnp.float32)
    D = a.shape[0]
    packed = jnp.stack([a,
                        jnp.asarray(b, jnp.float32),
                        jnp.asarray(g, jnp.float32),
                        jnp.asarray(k, jnp.float32)], axis=0)       # (4, D)
    rg = 128 // math.gcd(D, 128)                                    # 1 if D % 128 == 0
    # Only pre-tile if a minimum (8-row) lane-dense block still fits the byte budget.
    if rg > 1 and 8 * D * rg * 4 <= TARGET_BLOCK_BYTES:
        packed_flat = jnp.tile(packed, (1, rg))                     # (4, D*rg)
    else:
        rg, packed_flat = 1, packed
    return {"D": D, "row_group": rg, "packed": packed, "packed_flat": packed_flat}


def _pick_tile_rows(n_rows, row_bytes):
    """Rows per block: ~TARGET_BLOCK_BYTES, multiple of 8, >= 2 grid steps when possible."""
    if n_rows <= 8:
        return n_rows                                   # block == full dim (allowed)
    max_rows = max(8, (TARGET_BLOCK_BYTES // row_bytes) // 8 * 8)
    n_steps = max(2, pl.cdiv(n_rows, max_rows))         # keep both v7x TCs busy
    tile = ((pl.cdiv(n_rows, n_steps) + 7) // 8) * 8
    tile = max(8, tile)
    if tile >= n_rows:                                  # must be mult-of-8 or == full dim
        tile = n_rows
    return tile


def gk_forward(u, params, out_dtype=None):
    """u: (N, D). params: dict from make_gk_params. Returns z: (N, D) in out_dtype (default u.dtype)."""
    N, D = u.shape
    assert D == params["D"]
    out_dtype = jnp.dtype(out_dtype if out_dtype is not None else u.dtype)

    rg = params["row_group"]
    if rg > 1 and N % rg == 0:
        rows, width = N // rg, D * rg                   # lane-dense layout (width % 128 == 0)
        u_run, p_run = u.reshape(rows, width), params["packed_flat"]
    else:
        rows, width = N, D                              # plain layout (masked stores if D % 128)
        u_run, p_run = u, params["packed"]

    tile = _pick_tile_rows(rows, width * 4)             # size by 4 B/elem (conservative)
    grid = (pl.cdiv(rows, tile),)

    cost = pl.CostEstimate(
        flops=12 * N * D,
        transcendentals=3 * N * D,
        bytes_accessed=int(N * D * (u.dtype.itemsize + out_dtype.itemsize) + p_run.size * 4),
    )

    z = pl.pallas_call(
        _gk_kernel,
        out_shape=jax.ShapeDtypeStruct((rows, width), out_dtype),
        grid=grid,
        in_specs=[
            pl.BlockSpec((tile, width), lambda i: (i, 0)),   # u tile (native dtype)
            pl.BlockSpec((4, width), lambda i: (0, 0)),      # packed params (resident)
        ],
        out_specs=pl.BlockSpec((tile, width), lambda i: (i, 0)),
        compiler_params=pltpu.CompilerParams(
            dimension_semantics=("parallel",),
            vmem_limit_bytes=VMEM_LIMIT_BYTES),
        cost_estimate=cost,
    )(u_run, p_run)
    return z.reshape(N, D)


def reference_forward(u, a, b, g, k):
    """Pure-JAX mirror of the PyTorch module's forward."""
    return (a + b
            * (1.0 + 0.8 * (1.0 - jnp.exp(-g * u)) / (1.0 + jnp.exp(-g * u)))
            * (1.0 + u ** 2) ** k
            * u)


if __name__ == "__main__":
    key = jax.random.PRNGKey(0)
    k_u1, k_u2, k_a, k_b, k_g, k_k = jax.random.split(key, 6)

    D = 50  # module dim
    a = 0.5 * jax.random.normal(k_a, (D,), dtype=jnp.float32)
    b = 1.0 + 0.1 * jax.random.normal(k_b, (D,), dtype=jnp.float32)
    g = 0.5 * jax.random.normal(k_g, (D,), dtype=jnp.float32)
    kk = 0.2 * jax.random.normal(k_k, (D,), dtype=jnp.float32)

    params = make_gk_params(a, b, g, kk)   # packed / pre-tiled once, reused every call

    # Case 1: small batch (N=8) -> plain (N, D) layout path.
    u1 = jax.random.normal(k_u1, (8, D), dtype=jnp.float32)
    z1 = gk_forward(u1, params)
    jax.block_until_ready(z1)
    np.testing.assert_allclose(np.asarray(z1), np.asarray(reference_forward(u1, a, b, g, kk)),
                               rtol=1e-5, atol=1e-5)

    # Case 2: N divisible by the lane row-group (rg=64 for D=50) -> lane-dense layout path.
    u2 = jax.random.normal(k_u2, (128, D), dtype=jnp.float32)
    z2 = gk_forward(u2, params)
    jax.block_until_ready(z2)
    np.testing.assert_allclose(np.asarray(z2), np.asarray(reference_forward(u2, a, b, g, kk)),
                               rtol=1e-5, atol=1e-5)

    assert z1.shape == (8, D) and z2.shape == (128, D)
    print("KERNEL_OK")
</pallas_src>

<mosaic_0001>
module attributes {stable_mosaic.version = 11 : i64} {
  func.func @_gk_kernel(%arg0: i32, %arg1: memref<8x50xf32, #tpu.memory_space<vmem>>, %arg2: memref<4x50xf32, #tpu.memory_space<vmem>>, %arg3: memref<8x50xf32, #tpu.memory_space<vmem>>) attributes {dimension_semantics = [#tpu.dimension_semantics<parallel>], iteration_bounds = array<i64: 1>, scalar_prefetch = 0 : i64, scratch_operands = 0 : i64, tpu.core_type = #tpu.core_type<tc>, window_params = [{transform_indices = @transform_0, window_bounds = array<i64: 8, 50>}, {pipeline_mode = #tpu.pipeline_mode<synchronous>, transform_indices = @transform_1, window_bounds = array<i64: 4, 50>}, {transform_indices = @transform_2, window_bounds = array<i64: 8, 50>}]} {
    %c0 = arith.constant 0 : index
    %c0_0 = arith.constant 0 : index
    %0 = vector.load %arg1[%c0, %c0_0] : memref<8x50xf32, #tpu.memory_space<vmem>>, vector<8x50xf32>
    %c0_1 = arith.constant 0 : index
    %c0_2 = arith.constant 0 : index
    %1 = vector.load %arg2[%c0_1, %c0_2] : memref<4x50xf32, #tpu.memory_space<vmem>>, vector<4x50xf32>
    %2 = vector.extract_strided_slice %1 {offsets = [0, 0], sizes = [1, 50], strides = [1, 1]} : vector<4x50xf32> to vector<1x50xf32>
    %3 = vector.extract_strided_slice %1 {offsets = [1, 0], sizes = [1, 50], strides = [1, 1]} : vector<4x50xf32> to vector<1x50xf32>
    %4 = vector.extract_strided_slice %1 {offsets = [2, 0], sizes = [1, 50], strides = [1, 1]} : vector<4x50xf32> to vector<1x50xf32>
    %5 = vector.extract_strided_slice %1 {offsets = [3, 0], sizes = [1, 50], strides = [1, 1]} : vector<4x50xf32> to vector<1x50xf32>
    %6 = vector.broadcast %4 : vector<1x50xf32> to vector<8x50xf32>
    %7 = arith.mulf %6, %0 : vector<8x50xf32>
    %cst = arith.constant 5.000000e-01 : f32
    %8 = vector.broadcast %cst : f32 to vector<8x50xf32>
    %9 = arith.mulf %8, %7 : vector<8x50xf32>
    %10 = math.tanh %9 : vector<8x50xf32>
    %cst_3 = arith.constant 8.000000e-01 : f32
    %11 = vector.broadcast %cst_3 : f32 to vector<8x50xf32>
    %12 = arith.mulf %11, %10 : vector<8x50xf32>
    %cst_4 = arith.constant 1.000000e+00 : f32
    %13 = vector.broadcast %cst_4 : f32 to vector<8x50xf32>
    %14 = arith.addf %13, %12 : vector<8x50xf32>
    %15 = arith.mulf %0, %0 : vector<8x50xf32>
    %16 = math.log1p %15 : vector<8x50xf32>
    %17 = vector.broadcast %5 : vector<1x50xf32> to vector<8x50xf32>
    %18 = arith.mulf %17, %16 : vector<8x50xf32>
    %19 = math.exp %18 : vector<8x50xf32>
    %20 = vector.broadcast %3 : vector<1x50xf32> to vector<8x50xf32>
    %21 = arith.mulf %20, %14 : vector<8x50xf32>
    %22 = arith.mulf %21, %19 : vector<8x50xf32>
    %23 = arith.mulf %22, %0 : vector<8x50xf32>
    %24 = vector.broadcast %2 : vector<1x50xf32> to vector<8x50xf32>
    %25 = arith.addf %24, %23 : vector<8x50xf32>
    %c0_5 = arith.constant 0 : index
    %c0_6 = arith.constant 0 : index
    %26 = vector.load %arg3[%c0_5, %c0_6] : memref<8x50xf32, #tpu.memory_space<vmem>>, vector<8x50xf32>
    tpu.vector_store %arg3[%c0_5, %c0_6], %25 {strides = array<i32>} : memref<8x50xf32, #tpu.memory_space<vmem>>, vector<8x50xf32>,
    return
  }
  func.func @transform_0(%arg0: i32) -> (i32, i32) {
    %c0_i32 = arith.constant 0 : i32
    %c0_i32_0 = arith.constant 0 : i32
    return %arg0, %c0_i32 : i32, i32
  }
  func.func @transform_1(%arg0: i32) -> (i32, i32) {
    %c0_i32 = arith.constant 0 : i32
    %c0_i32_0 = arith.constant 0 : i32
    %c0_i32_1 = arith.constant 0 : i32
    return %c0_i32, %c0_i32_0 : i32, i32
  }
  func.func @transform_2(%arg0: i32) -> (i32, i32) {
    %c0_i32 = arith.constant 0 : i32
    %c0_i32_0 = arith.constant 0 : i32
    return %arg0, %c0_i32 : i32, i32
  }
}

</mosaic_0001>

<llo_original>
// kernel: tpu_custom_call.1
$region0: #{tpu_custom_call.1}
  #allocation0 [shape = 'u32[]', space=smem, size = 0x4, offset = 0x4, fixed_abs, tag = 'smem constant byte address 0x4 - core index']
  #allocation1 [shape = 'u32[144,128]{1,0:T(1,128)}', space=vmem, size = 0x12000, scoped, tag = 'internal scratch']
  %s0 = inlined_call_operand.hbm [shape: f32[8,50], index: 0, kind: input, shape index: {}]
  %s1 = inlined_call_operand.hbm [shape: f32[4,50], index: 1, kind: input, shape index: {}]
  %s2 = inlined_call_operand.hbm [shape: f32[8,50], index: 2, kind: output, shape index: {}]
  %s3 = sld [smem:[#allocation0]]
  $region26: #{tpu_custom_call.1} parent=0
    _
  %s5 = ssub.s32 1, %s3
  %s6 = scalar_select 0, %s5, %s3
  $region1: #{tpu_custom_call.1} parent=0
    #allocation2 [shape = 'u8[4096]{0}', space=vmem, size = 0x1000, scoped, tag = 'input window, operand 0, single buffered']
    #allocation3 [shape = 's32[1]{0}', space=sflag, size = 0x4, scoped, tag = 'scoped memory for tpu_custom_call.1']
    #allocation4 [shape = 's32[1]{0}', space=sflag, size = 0x4, scoped, tag = 'scoped memory for tpu_custom_call.1']
    #allocation5 [shape = 'u8[2048]{0}', space=vmem, size = 0x800, scoped, tag = 'input window, operand 1, single buffered']
    #allocation6 [shape = 's32[1]{0}', space=sflag, size = 0x4, scoped, tag = 'scoped memory for tpu_custom_call.1']
    #allocation7 [shape = 'u8[4096]{0}', space=vmem, size = 0x1000, scoped, tag = 'output window, operand 0, single buffered']
    %7 = vsyncpa [#allocation3], 0
    %8 = vsyncpa [#allocation6], 0
    %9 = vsyncpa [#allocation4], 0
    // Predicated region
    $region2: #{tpu_custom_call.1} parent=1 // pred_check
      _
    $region3: #{tpu_custom_call.1} parent=1 // pred_check_branch
      %11 = sbr.rel (0) target = $region5
    $region4: #{tpu_custom_call.1} parent=1 // pred_region
      %s13 = ssub.s32 128, 128
      %14 = vsyncadd [#allocation3], %s13
      %s16 = sshll.u32 [#allocation2], 4
      %s17 = int_to_ptr.vmem [resolvable:$true] %s16
      %19 = dma.hbm_to_vmem [thread:$0]  %s0, 128, %s17, [#allocation3]
    $region5: #{tpu_custom_call.1} parent=1 // pred_fallthru
      _
    // Predicated region
    $region6: #{tpu_custom_call.1} parent=1 // pred_check
      _
    $region7: #{tpu_custom_call.1} parent=1 // pred_check_branch
      %21 = sbr.rel (0) target = $region9
    $region8: #{tpu_custom_call.1} parent=1 // pred_region
      %s23 = ssub.s32 64, 64
      %24 = vsyncadd [#allocation6], %s23
      %s26 = sshll.u32 [#allocation5], 4
      %s27 = int_to_ptr.vmem [resolvable:$true] %s26
      %29 = dma.hbm_to_vmem [thread:$0]  %s1, 64, %s27, [#allocation6]
    $region9: #{tpu_custom_call.1} parent=1 // pred_fallthru
      _
    // Predicated region
    $region10: #{tpu_custom_call.1} parent=1 // pred_check
      _
    $region11: #{tpu_custom_call.1} parent=1 // pred_check_branch
      %31 = sbr.rel (0) target = $region13
    $region12: #{tpu_custom_call.1} parent=1 // pred_region
      %32 = dma.done [#allocation3], 128
    $region13: #{tpu_custom_call.1} parent=1 // pred_fallthru
      _
    // Predicated region
    $region14: #{tpu_custom_call.1} parent=1 // pred_check
      _
    $region15: #{tpu_custom_call.1} parent=1 // pred_check_branch
      %34 = sbr.rel (0) target = $region17
    $region16: #{tpu_custom_call.1} parent=1 // pred_region
      %35 = dma.done [#allocation6], 64
    $region17: #{tpu_custom_call.1} parent=1 // pred_fallthru
      _
    %v36 = vld [vmem:[#allocation2] sm:$0xff]
    %v37 = vld [vmem:[#allocation5] sm:$0xf]
    %v38 = vlaneseq
    %v39 = vshrl.u32 %v38, 7
    %v40 = vsub.s32 2, %v39
    %v41 = vrot.slane %v37, %v40
    %v42 = vmul.f32 %v41, %v36
    %v43 = vmul.f32 %v42, 0.5
    %v44 = vtanh.pop %v43
    %v45 = vmul.f32 %v44, 0.8
    %v46 = vadd.f32 %v45, 1.0
    %v47 = vmul.f32 %v36, %v36
    %v48 = vadd.f32 %v47, 1.0
    %v49 = vlog2.pop %v48
    %v50 = vmul.f32 %v49, 0.6931472
    %v51 = vmul.f32 -0.5, %v47
    %v52 = vadd.f32 %v51, 1.0
    %v53 = vmul.f32 %v52, %v47
    %v54 = vand.u32 2147483647, %v47
    %vm55 = vcmp.lt.f32.partialorder %v54, 0.0004427343
    %v56 = vsel %vm55, %v53, %v50
    %v57 = vlaneseq
    %v58 = vshrl.u32 %v57, 7
    %v59 = vsub.s32 3, %v58
    %v60 = vrot.slane %v37, %v59
    %v61 = vmul.f32 %v60, %v56
    %v62 = vmul.f32 %v61, 1.442695
    %v63 = vpow.pop %v62
    %v64 = vlaneseq
    %v65 = vshrl.u32 %v64, 7
    %v66 = vsub.s32 1, %v65
    %v67 = vrot.slane %v37, %v66
    %v68 = vmul.f32 %v67, %v46
    %v69 = vmul.f32 %v68, %v63
    %v70 = vmul.f32 %v69, %v36
    %v71 = vlaneseq
    %v72 = vshrl.u32 %v71, 7
    %v73 = vsub.s32 0, %v72
    %v74 = vrot.slane %v37, %v73
    %v75 = vadd.f32 %v74, %v70
    %vm76 = vcmask 408576
    %77 = vst.msk [vmem:[#allocation7] sm:$0xff] %vm76, %v75
    // Predicated region
    $region18: #{tpu_custom_call.1} parent=1 // pred_check
      _
    $region19: #{tpu_custom_call.1} parent=1 // pred_check_branch
      %79 = sbr.rel (0) target = $region21
    $region20: #{tpu_custom_call.1} parent=1 // pred_region
      %s81 = ssub.s32 128, 128
      %82 = vsyncadd [#allocation4], %s81
      %s84 = sshll.u32 [#allocation7], 4
      %s85 = int_to_ptr.vmem [resolvable:$true] %s84
      %87 = dma.vmem_to_hbm [thread:$0]  %s85, 128, %s2, [#allocation4]
    $region21: #{tpu_custom_call.1} parent=1 // pred_fallthru
      _
    // Predicated region
    $region22: #{tpu_custom_call.1} parent=1 // pred_check
      _
    $region23: #{tpu_custom_call.1} parent=1 // pred_check_branch
      %89 = sbr.rel (0) target = $region25
    $region24: #{tpu_custom_call.1} parent=1 // pred_region
      %90 = dma.done [#allocation4], 128
    $region25: #{tpu_custom_call.1} parent=1 // pred_fallthru
      _
    %91 = vsyncpa [#allocation3], 1
    %92 = vsyncpa [#allocation6], 1
    %93 = vsyncpa [#allocation4], 1

</llo_original>
